<compile_context>
chip_gen: v5e
topology: v5e:2x2
jax: 0.10.0
libtpu: 0.0.40
codegen_flags: <defaults>
</compile_context>

<pallas_src>
import functools

import jax
import jax.numpy as jnp
from jax.experimental import pallas as pl
from jax.experimental.pallas import tpu as pltpu


def _round_up(x, m):
    return (x + m - 1) // m * m


def _make_kernel(tap_offsets, c_in, m_blk):
    """Fused conv+BN kernel body: stage taps -> one big-K MXU matmul -> BN add."""
    n_taps = len(tap_offsets)

    def kernel(xf_ref, w_ref, shift_ref, o_ref, lhs_ref):
        # xf_ref:    (C_in, L_blk)          ReLU'd, padded, decimated, flattened
        #                                   block of B lane-concatenated images
        # w_ref:     (C_out_p, KH*KW*C_in)  BN-scale-folded weights
        # shift_ref: (C_out_p, 1)           BN shift
        # o_ref:     (C_out_p, M_blk)       lane-dense flattened output
        # lhs_ref:   (KH*KW*C_in, M_blk)    VMEM staging scratch (big-K lhs)
        if n_taps == 1:
            lhs = xf_ref[:, pl.ds(tap_offsets[0], m_blk)]
        else:
            # One contiguous (C_in, M_blk) copy per tap; rows t*C_in..+C_in of
            # the scratch hold the tap-t shifted view -> K order = (tap, c_in).
            for t, off in enumerate(tap_offsets):
                lhs_ref[pl.ds(t * c_in, c_in), :] = xf_ref[:, pl.ds(off, m_blk)]
            lhs = lhs_ref[...]
        acc = jnp.dot(w_ref[...], lhs, preferred_element_type=jnp.float32)
        o_ref[...] = (acc + shift_ref[...]).astype(o_ref.dtype)

    return kernel


@functools.partial(
    jax.jit,
    static_argnames=("stride", "padding", "dilation", "eps", "compute_dtype"))
def relu_conv_bn(x, weight, gamma, beta, running_mean, running_var, *,
                 stride, padding, dilation, eps=1e-5,
                 compute_dtype=jnp.bfloat16):
    """x: (N, C_in, H, W) f32; weight: (C_out, C_in, KH, KW). Returns NCHW f32."""
    n, c_in, h, w = x.shape
    c_out, _, kh, kw = weight.shape
    s = stride

    hp = h + 2 * padding
    wp = w + 2 * padding
    h_out = (hp - dilation * (kh - 1) - 1) // s + 1
    w_out = (wp - dilation * (kw - 1) - 1) // s + 1

    # ---- space-to-depth (stride-decimation) geometry ------------------------
    hp_s = _round_up(hp, s)
    wp_s = _round_up(wp, s)
    hph = hp_s // s               # per-phase height
    wph = wp_s // s               # per-phase width == output row pitch
    l_img = s * s * hph * wph     # flattened per-image length == per-image pitch

    # Static flat offsets of the KH*KW taps in the decimated per-image layout.
    # With this layout every tap read is unit-stride on lanes for any stride.
    tap_offsets = []
    for i in range(kh):
        for j in range(kw):
            a, b = i * dilation, j * dilation
            py, qy = a % s, a // s
            px, qx = b % s, b // s
            tap_offsets.append((py * s + px) * hph * wph + qy * wph + qx)
    tap_offsets = tuple(tap_offsets)
    max_off = max(tap_offsets)
    k_dim = kh * kw * c_in

    c_out_p = _round_up(c_out, 8)
    in_itemsize = jnp.dtype(compute_dtype).itemsize
    out_itemsize = 4

    # ---- choose images-per-step (batch block) --------------------------------
    def _block_geom(b):
        m_blk = _round_up(b * l_img, 128)            # lane-dense output lanes
        l_blk = _round_up(m_blk + max_off, 128)      # + tap halo, in bounds
        return m_blk, l_blk

    def _vmem_bytes(b):
        m_blk, l_blk = _block_geom(b)
        in_b = c_in * l_blk * in_itemsize
        out_b = c_out_p * m_blk * out_itemsize
        lhs_b = k_dim * m_blk * in_itemsize
        w_b = c_out_p * k_dim * in_itemsize + c_out_p * 4
        return 2 * (in_b + out_b + w_b) + lhs_b      # 2-deep pipeline + scratch

    target_lanes = 4096                              # amortize grid/DMA overhead
    b_img = max(1, min(n, target_lanes // max(l_img, 1)))
    if n >= 2:
        b_img = min(b_img, (n + 1) // 2)             # keep >= 2 grid steps (v7x)
    # Stay well inside the v7x scoped-VMEM budget (32 MiB scoped / 64 MiB phys).
    while b_img > 1 and _vmem_bytes(b_img) > 8 * 1024 * 1024:
        b_img -= 1
    nb = -(-n // b_img)
    n_pad = nb * b_img
    m_blk, l_blk = _block_geom(b_img)

    # ---- input prep: ReLU + pad + space-to-depth + pack + cast (one pass) ----
    xr = jnp.maximum(x, 0.0)
    if n_pad != n:
        xr = jnp.pad(xr, ((0, n_pad - n), (0, 0), (0, 0), (0, 0)))
    xr = jnp.pad(xr, ((0, 0), (0, 0),
                      (padding, padding + hp_s - hp),
                      (padding, padding + wp_s - wp)))
    xr = xr.reshape(n_pad, c_in, hph, s, wph, s).transpose(0, 1, 3, 5, 2, 4)
    xf = xr.reshape(n_pad, c_in, l_img)
    # Concatenate the B images of each grid step along the lane axis with a
    # TIGHT per-image pitch.  Tap reads near an image's tail may bleed into the
    # next image / the zero tail, but (by construction, useful flat index <
    # l_img) they only land in garbage lanes that are sliced off below.
    xf = xf.reshape(nb, b_img, c_in, l_img).transpose(0, 2, 1, 3)
    xf = xf.reshape(nb, c_in, b_img * l_img)
    xf = jnp.pad(xf, ((0, 0), (0, 0), (0, l_blk - b_img * l_img)))
    xf = xf.astype(compute_dtype)

    # ---- fold BN scale into the weights; keep shift as a per-channel add -----
    scale = gamma / jnp.sqrt(running_var + eps)                   # (C_out,)
    shift = beta - running_mean * scale                           # (C_out,)
    w_scaled = weight.astype(jnp.float32) * scale[:, None, None, None]
    # (C_out, C_in, KH, KW) -> (C_out_p, KH*KW*C_in); K order = (tap, c_in),
    # matching the staged lhs rows.
    w_flat = w_scaled.transpose(0, 2, 3, 1).reshape(c_out, k_dim)
    if c_out_p != c_out:
        w_flat = jnp.pad(w_flat, ((0, c_out_p - c_out), (0, 0)))
    w_flat = w_flat.astype(compute_dtype)
    shift_col = shift
    if c_out_p != c_out:
        shift_col = jnp.pad(shift_col, (0, c_out_p - c_out))
    shift_col = shift_col.reshape(c_out_p, 1).astype(jnp.float32)

    kernel = _make_kernel(tap_offsets, c_in, m_blk)

    flops = 2 * n * c_out * c_in * kh * kw * h_out * w_out
    bytes_accessed = (xf.size * in_itemsize
                      + w_flat.size * in_itemsize + c_out_p * 4
                      + nb * c_out_p * m_blk * out_itemsize)

    out = pl.pallas_call(
        kernel,
        out_shape=jax.ShapeDtypeStruct((nb, c_out_p, m_blk), jnp.float32),
        grid_spec=pltpu.PrefetchScalarGridSpec(
            num_scalar_prefetch=0,
            grid=(nb,),                                           # B images/step
            in_specs=[
                pl.BlockSpec((None, c_in, l_blk), lambda i: (i, 0, 0)),
                pl.BlockSpec((c_out_p, k_dim), lambda i: (0, 0)),
                pl.BlockSpec((c_out_p, 1), lambda i: (0, 0)),
            ],
            out_specs=pl.BlockSpec((None, c_out_p, m_blk), lambda i: (i, 0, 0)),
            scratch_shapes=[pltpu.VMEM((k_dim, m_blk), compute_dtype)],
        ),
        compiler_params=pltpu.CompilerParams(
            dimension_semantics=("parallel",)),                   # megacore batch
        cost_estimate=pl.CostEstimate(
            flops=flops, transcendentals=0, bytes_accessed=bytes_accessed),
    )(xf, w_flat, shift_col)

    # ---- un-concatenate images and map back to NCHW --------------------------
    if m_blk != b_img * l_img:
        out = out[:, :, :b_img * l_img]
    # Free reshape when b_img == 1; a single XLA transpose otherwise.
    out = out.reshape(nb, c_out_p, b_img, l_img).transpose(0, 2, 1, 3)
    out = out.reshape(n_pad, c_out_p, l_img)
    if n_pad != n:
        out = out[:n]
    if c_out_p != c_out:          # skipped whenever C_out is a multiple of 8
        out = out[:, :c_out]
    out = out[:, :, :h_out * wph].reshape(n, c_out, h_out, wph)
    if wph != w_out:
        out = out[:, :, :, :w_out]
    return out


def _reference(x, weight, gamma, beta, running_mean, running_var,
               *, stride, padding, dilation, eps=1e-5):
    """Plain-JAX reference: ReLU -> conv2d -> eval-mode BatchNorm2d."""
    xr = jnp.maximum(x, 0.0)
    y = jax.lax.conv_general_dilated(
        xr, weight,
        window_strides=(stride, stride),
        padding=[(padding, padding), (padding, padding)],
        rhs_dilation=(dilation, dilation),
        dimension_numbers=("NCHW", "OIHW", "NCHW"),
        precision=jax.lax.Precision.HIGHEST)
    scale = (gamma / jnp.sqrt(running_var + eps)).reshape(1, -1, 1, 1)
    shift = (beta - running_mean * gamma / jnp.sqrt(running_var + eps)
             ).reshape(1, -1, 1, 1)
    return y * scale + shift


if __name__ == "__main__":
    def run_case(name, *, n, c_in, c_out, h, w, ksz, stride, padding, dilation,
                 compute_dtype, atol, key):
        kx, kw_, kg, kb, km, kv = jax.random.split(key, 6)
        x = jax.random.normal(kx, (n, c_in, h, w), dtype=jnp.float32)
        weight = jax.random.normal(
            kw_, (c_out, c_in, ksz, ksz), dtype=jnp.float32) * 0.1
        gamma = 1.0 + 0.1 * jax.random.normal(kg, (c_out,), dtype=jnp.float32)
        beta = 0.1 * jax.random.normal(kb, (c_out,), dtype=jnp.float32)
        mean = 0.1 * jax.random.normal(km, (c_out,), dtype=jnp.float32)
        var = jnp.abs(jax.random.normal(kv, (c_out,), dtype=jnp.float32)) + 0.5

        ref = _reference(x, weight, gamma, beta, mean, var,
                         stride=stride, padding=padding, dilation=dilation)
        out = relu_conv_bn(x, weight, gamma, beta, mean, var,
                           stride=stride, padding=padding, dilation=dilation,
                           compute_dtype=compute_dtype)
        out = jax.block_until_ready(out)
        assert out.shape == ref.shape, (name, out.shape, ref.shape)
        err = float(jnp.max(jnp.abs(out - ref)))
        assert jnp.allclose(out, ref, atol=atol, rtol=atol), (name, err)

    root = jax.random.PRNGKey(0)
    k1, k2, k3, k4 = jax.random.split(root, 4)

    # NAS-Bench-201 conv_3x3: stride=1, padding=1, dilation=1.
    run_case("3x3_s1_f32", n=2, c_in=4, c_out=8, h=16, w=16, ksz=3,
             stride=1, padding=1, dilation=1,
             compute_dtype=jnp.float32, atol=2e-2, key=k1)
    run_case("3x3_s1_bf16", n=2, c_in=4, c_out=8, h=16, w=16, ksz=3,
             stride=1, padding=1, dilation=1,
             compute_dtype=jnp.bfloat16, atol=5e-2, key=k1)
    # stride=2: exercises the space-to-depth decimated (unit-stride) path.
    run_case("3x3_s2_f32", n=2, c_in=4, c_out=8, h=16, w=16, ksz=3,
             stride=2, padding=1, dilation=1,
             compute_dtype=jnp.float32, atol=2e-2, key=k2)
    # NAS-Bench-201 conv_1x1 (single-tap fast path, no staging scratch use).
    run_case("1x1_s1_f32", n=2, c_in=4, c_out=8, h=16, w=16, ksz=1,
             stride=1, padding=0, dilation=1,
             compute_dtype=jnp.float32, atol=2e-2, key=k3)
    # dilation=2 path.
    run_case("3x3_d2_f32", n=2, c_in=4, c_out=8, h=16, w=16, ksz=3,
             stride=1, padding=2, dilation=2,
             compute_dtype=jnp.float32, atol=2e-2, key=k4)

    print("KERNEL_OK")
</pallas_src>

<mosaic_0001>
module attributes {stable_mosaic.version = 11 : i64} {
  func.func @kernel(%arg0: i32, %arg1: memref<1x4x512xf32, #tpu.memory_space<vmem>>, %arg2: memref<8x36xf32, #tpu.memory_space<vmem>>, %arg3: memref<8x1xf32, #tpu.memory_space<vmem>>, %arg4: memref<1x8x384xf32, #tpu.memory_space<vmem>>, %arg5: memref<36x384xf32, #tpu.memory_space<vmem>>) attributes {dimension_semantics = [#tpu.dimension_semantics<parallel>], iteration_bounds = array<i64: 2>, scalar_prefetch = 0 : i64, scratch_operands = 1 : i64, tpu.core_type = #tpu.core_type<tc>, window_params = [{transform_indices = @transform_0, window_bounds = array<i64: 1, 4, 512>}, {pipeline_mode = #tpu.pipeline_mode<synchronous>, transform_indices = @transform_1, window_bounds = array<i64: 8, 36>}, {pipeline_mode = #tpu.pipeline_mode<synchronous>, transform_indices = @transform_2, window_bounds = array<i64: 8, 1>}, {transform_indices = @transform_3, window_bounds = array<i64: 1, 8, 384>}]} {
    %c0 = arith.constant 0 : index
    %c0_0 = arith.constant 0 : index
    %c0_1 = arith.constant 0 : index
    %0 = vector.load %arg1[%c0, %c0_0, %c0_1] : memref<1x4x512xf32, #tpu.memory_space<vmem>>, vector<1x4x384xf32>
    %1 = vector.shape_cast %0 : vector<1x4x384xf32> to vector<4x384xf32>
    %c0_2 = arith.constant 0 : index
    %c0_3 = arith.constant 0 : index
    %2 = vector.load %arg5[%c0_2, %c0_3] : memref<36x384xf32, #tpu.memory_space<vmem>>, vector<4x384xf32>
    tpu.vector_store %arg5[%c0_2, %c0_3], %1 {strides = array<i32>} : memref<36x384xf32, #tpu.memory_space<vmem>>, vector<4x384xf32>,
    %c0_4 = arith.constant 0 : index
    %c0_5 = arith.constant 0 : index
    %c1 = arith.constant 1 : index
    %3 = vector.load %arg1[%c0_4, %c0_5, %c1] : memref<1x4x512xf32, #tpu.memory_space<vmem>>, vector<1x4x384xf32>
    %4 = vector.shape_cast %3 : vector<1x4x384xf32> to vector<4x384xf32>
    %c4 = arith.constant 4 : index
    %c0_6 = arith.constant 0 : index
    %5 = vector.load %arg5[%c4, %c0_6] : memref<36x384xf32, #tpu.memory_space<vmem>>, vector<4x384xf32>
    tpu.vector_store %arg5[%c4, %c0_6], %4 {strides = array<i32>} : memref<36x384xf32, #tpu.memory_space<vmem>>, vector<4x384xf32>,
    %c0_7 = arith.constant 0 : index
    %c0_8 = arith.constant 0 : index
    %c2 = arith.constant 2 : index
    %6 = vector.load %arg1[%c0_7, %c0_8, %c2] : memref<1x4x512xf32, #tpu.memory_space<vmem>>, vector<1x4x384xf32>
    %7 = vector.shape_cast %6 : vector<1x4x384xf32> to vector<4x384xf32>
    %c8 = arith.constant 8 : index
    %c0_9 = arith.constant 0 : index
    %8 = vector.load %arg5[%c8, %c0_9] : memref<36x384xf32, #tpu.memory_space<vmem>>, vector<4x384xf32>
    tpu.vector_store %arg5[%c8, %c0_9], %7 {strides = array<i32>} : memref<36x384xf32, #tpu.memory_space<vmem>>, vector<4x384xf32>,
    %c0_10 = arith.constant 0 : index
    %c0_11 = arith.constant 0 : index
    %c18 = arith.constant 18 : index
    %9 = vector.load %arg1[%c0_10, %c0_11, %c18] : memref<1x4x512xf32, #tpu.memory_space<vmem>>, vector<1x4x384xf32>
    %10 = vector.shape_cast %9 : vector<1x4x384xf32> to vector<4x384xf32>
    %c12 = arith.constant 12 : index
    %c0_12 = arith.constant 0 : index
    %11 = vector.load %arg5[%c12, %c0_12] : memref<36x384xf32, #tpu.memory_space<vmem>>, vector<4x384xf32>
    tpu.vector_store %arg5[%c12, %c0_12], %10 {strides = array<i32>} : memref<36x384xf32, #tpu.memory_space<vmem>>, vector<4x384xf32>,
    %c0_13 = arith.constant 0 : index
    %c0_14 = arith.constant 0 : index
    %c19 = arith.constant 19 : index
    %12 = vector.load %arg1[%c0_13, %c0_14, %c19] : memref<1x4x512xf32, #tpu.memory_space<vmem>>, vector<1x4x384xf32>
    %13 = vector.shape_cast %12 : vector<1x4x384xf32> to vector<4x384xf32>
    %c16 = arith.constant 16 : index
    %c0_15 = arith.constant 0 : index
    %14 = vector.load %arg5[%c16, %c0_15] : memref<36x384xf32, #tpu.memory_space<vmem>>, vector<4x384xf32>
    tpu.vector_store %arg5[%c16, %c0_15], %13 {strides = array<i32>} : memref<36x384xf32, #tpu.memory_space<vmem>>, vector<4x384xf32>,
    %c0_16 = arith.constant 0 : index
    %c0_17 = arith.constant 0 : index
    %c20 = arith.constant 20 : index
    %15 = vector.load %arg1[%c0_16, %c0_17, %c20] : memref<1x4x512xf32, #tpu.memory_space<vmem>>, vector<1x4x384xf32>
    %16 = vector.shape_cast %15 : vector<1x4x384xf32> to vector<4x384xf32>
    %c20_18 = arith.constant 20 : index
    %c0_19 = arith.constant 0 : index
    %17 = vector.load %arg5[%c20_18, %c0_19] : memref<36x384xf32, #tpu.memory_space<vmem>>, vector<4x384xf32>
    tpu.vector_store %arg5[%c20_18, %c0_19], %16 {strides = array<i32>} : memref<36x384xf32, #tpu.memory_space<vmem>>, vector<4x384xf32>,
    %c0_20 = arith.constant 0 : index
    %c0_21 = arith.constant 0 : index
    %c36 = arith.constant 36 : index
    %18 = vector.load %arg1[%c0_20, %c0_21, %c36] : memref<1x4x512xf32, #tpu.memory_space<vmem>>, vector<1x4x384xf32>
    %19 = vector.shape_cast %18 : vector<1x4x384xf32> to vector<4x384xf32>
    %c24 = arith.constant 24 : index
    %c0_22 = arith.constant 0 : index
    %20 = vector.load %arg5[%c24, %c0_22] : memref<36x384xf32, #tpu.memory_space<vmem>>, vector<4x384xf32>
    tpu.vector_store %arg5[%c24, %c0_22], %19 {strides = array<i32>} : memref<36x384xf32, #tpu.memory_space<vmem>>, vector<4x384xf32>,
    %c0_23 = arith.constant 0 : index
    %c0_24 = arith.constant 0 : index
    %c37 = arith.constant 37 : index
    %21 = vector.load %arg1[%c0_23, %c0_24, %c37] : memref<1x4x512xf32, #tpu.memory_space<vmem>>, vector<1x4x384xf32>
    %22 = vector.shape_cast %21 : vector<1x4x384xf32> to vector<4x384xf32>
    %c28 = arith.constant 28 : index
    %c0_25 = arith.constant 0 : index
    %23 = vector.load %arg5[%c28, %c0_25] : memref<36x384xf32, #tpu.memory_space<vmem>>, vector<4x384xf32>
    tpu.vector_store %arg5[%c28, %c0_25], %22 {strides = array<i32>} : memref<36x384xf32, #tpu.memory_space<vmem>>, vector<4x384xf32>,
    %c0_26 = arith.constant 0 : index
    %c0_27 = arith.constant 0 : index
    %c38 = arith.constant 38 : index
    %24 = vector.load %arg1[%c0_26, %c0_27, %c38] : memref<1x4x512xf32, #tpu.memory_space<vmem>>, vector<1x4x384xf32>
    %25 = vector.shape_cast %24 : vector<1x4x384xf32> to vector<4x384xf32>
    %c32 = arith.constant 32 : index
    %c0_28 = arith.constant 0 : index
    %26 = vector.load %arg5[%c32, %c0_28] : memref<36x384xf32, #tpu.memory_space<vmem>>, vector<4x384xf32>
    tpu.vector_store %arg5[%c32, %c0_28], %25 {strides = array<i32>} : memref<36x384xf32, #tpu.memory_space<vmem>>, vector<4x384xf32>,
    %c0_29 = arith.constant 0 : index
    %c0_30 = arith.constant 0 : index
    %27 = vector.load %arg5[%c0_29, %c0_30] : memref<36x384xf32, #tpu.memory_space<vmem>>, vector<36x384xf32>
    %c0_31 = arith.constant 0 : index
    %c0_32 = arith.constant 0 : index
    %28 = vector.load %arg2[%c0_31, %c0_32] : memref<8x36xf32, #tpu.memory_space<vmem>>, vector<8x36xf32>
    %cst = arith.constant dense<0.000000e+00> : vector<8x384xf32>
    %29 = tpu.matmul %28, %27, %cst {dimension_numbers = #tpu.dot_dimension_numbers<[1], [0], [0], [1], [0, 0, 1, 1], [], []>} : vector<8x36xf32>, vector<36x384xf32>, vector<8x384xf32> -> vector<8x384xf32>
    %c0_33 = arith.constant 0 : index
    %c0_34 = arith.constant 0 : index
    %30 = vector.load %arg3[%c0_33, %c0_34] : memref<8x1xf32, #tpu.memory_space<vmem>>, vector<8x1xf32>
    %31 = vector.broadcast %30 : vector<8x1xf32> to vector<8x384xf32>
    %32 = arith.addf %29, %31 : vector<8x384xf32>
    %c0_35 = arith.constant 0 : index
    %c0_36 = arith.constant 0 : index
    %c0_37 = arith.constant 0 : index
    %33 = vector.load %arg4[%c0_35, %c0_36, %c0_37] : memref<1x8x384xf32, #tpu.memory_space<vmem>>, vector<1x8x384xf32>
    %34 = vector.shape_cast %33 : vector<1x8x384xf32> to vector<8x384xf32>
    %35 = vector.shape_cast %32 : vector<8x384xf32> to vector<1x8x384xf32>
    tpu.vector_store %arg4[%c0_35, %c0_36, %c0_37], %35 {strides = array<i32>} : memref<1x8x384xf32, #tpu.memory_space<vmem>>, vector<1x8x384xf32>,
    return
  }
  func.func @transform_0(%arg0: i32) -> (i32, i32, i32) {
    %c0_i32 = arith.constant 0 : i32
    %c0_i32_0 = arith.constant 0 : i32
    %c0_i32_1 = arith.constant 0 : i32
    return %arg0, %c0_i32, %c0_i32_0 : i32, i32, i32
  }
  func.func @transform_1(%arg0: i32) -> (i32, i32) {
    %c0_i32 = arith.constant 0 : i32
    %c0_i32_0 = arith.constant 0 : i32
    %c0_i32_1 = arith.constant 0 : i32
    return %c0_i32, %c0_i32_0 : i32, i32
  }
  func.func @transform_2(%arg0: i32) -> (i32, i32) {
    %c0_i32 = arith.constant 0 : i32
    %c0_i32_0 = arith.constant 0 : i32
    %c0_i32_1 = arith.constant 0 : i32
    return %c0_i32, %c0_i32_0 : i32, i32
  }
  func.func @transform_3(%arg0: i32) -> (i32, i32, i32) {
    %c0_i32 = arith.constant 0 : i32
    %c0_i32_0 = arith.constant 0 : i32
    %c0_i32_1 = arith.constant 0 : i32
    return %arg0, %c0_i32, %c0_i32_0 : i32, i32, i32
  }
}

</mosaic_0001>

<llo_original>
// kernel: relu_conv_bn.1
$region0: #{relu_conv_bn.1}
  #allocation0 [shape = 'u32[]', space=smem, size = 0x4, offset = 0x4, fixed_abs, tag = 'smem constant byte address 0x4 - core index']
  #allocation1 [shape = 'u32[72,128]{1,0:T(1,128)}', space=vmem, size = 0x9000, scoped, tag = 'internal scratch']
  #allocation2 [shape = 'f32[36,384]{1,0:T(8,128)}', space=vmem, size = 0xf000, scoped, tag = 'scratch operand']
  %s0 = inlined_call_operand.vmem [shape: f32[2,4,512], index: 0, kind: input, shape index: {}]
  %s1 = inlined_call_operand.vmem [shape: f32[8,36], index: 1, kind: input, shape index: {}]
  %s2 = inlined_call_operand.vmem [shape: f32[8,1], index: 2, kind: input, shape index: {}]
  %s3 = inlined_call_operand.vmem [shape: f32[2,8,384], index: 3, kind: output, shape index: {}]
  %s4 = sld [smem:[#allocation0]]
  $region45: #{relu_conv_bn.1} parent=0
    _
  %s6 = ssub.s32 1, %s4
  %s7 = scalar_select 0, %s6, %s4
  loop: start=0, step=1, limit=4
  $region2: #{relu_conv_bn.1} parent=0 // loop_pre_header
    _
  $region3: #{relu_conv_bn.1} parent=0 // loop_header
    %s9 = sphi 0, %s13
    %p10 = scmp.ge.s32.totalorder %s9, 4
    %s19 = sphi 0, %s21
    %s22 = sphi 0, %s19
    %s23 = sphi 0, %s22
    %s39 = sphi 0, %s23
    %s43 = sphi 0, %s43
    %s45 = sphi 0, %s43
    %s46 = sphi 0, %s45
    %s60 = sphi 0, %s46
    %s64 = sphi 0, %s64
    %s66 = sphi 0, %s64
    %s67 = sphi 0, %s66
    %s81 = sphi 0, %s67
    %s87 = sphi 0, %s89
    %s90 = sphi 0, %s87
    %s91 = sphi 0, %s90
    %s107 = sphi 0, %s91
  $region4: #{relu_conv_bn.1} parent=0 // loop_header_branch
    %12 = sbr.rel (%p10) target = $region8
  $region5: #{relu_conv_bn.1} parent=0 // loop_body
    %s14 = ssub.s32 %s9, 1
    %s15 = ssub.s32 %s9, 2
    %s16 = sadd.s32 %s9, 1
    %s17 = ssub.s32 %s9, %s16
    %p18 = scmp.eq.s32.totalorder %s17, 0
    %s20 = sadd.s32 %s19, 1
    %s21 = scalar_select %p18, %s19, %s20
    %p24 = pneg %p18
    %p25 = scmp.eq.s32.totalorder %s9, 1
    %p26 = por %p24, %p25
    %p27 = scmp.ne.s32.totalorder %s19, %s22
    %p28 = scmp.eq.s32.totalorder %s9, 0
    %p29 = por %p27, %p28
    %p30 = scmp.ne.s32.totalorder %s19, %s22
    %p31 = scmp.eq.s32.totalorder %s14, 1
    %p32 = por %p30, %p31
    %p33 = scmp.ne.s32.totalorder %s22, %s23
    %p34 = scmp.eq.s32.totalorder %s14, 0
    %p35 = por %p33, %p34
    %p36 = scmp.ne.s32.totalorder %s22, %s23
    %p37 = scmp.eq.s32.totalorder %s15, 1
    %p38 = por %p36, %p37
    %p40 = scmp.ne.s32.totalorder %s23, %s39
    %p41 = scmp.eq.s32.totalorder %s15, 0
    %p42 = por %p40, %p41
    %s44 = sadd.s32 %s43, 1
    %p47 = scmp.eq.s32.totalorder %s9, 1
    %p48 = scmp.ne.s32.totalorder %s43, %s45
    %p49 = scmp.eq.s32.totalorder %s9, 0
    %p50 = por %p48, %p49
    %p51 = scmp.ne.s32.totalorder %s43, %s45
    %p52 = scmp.eq.s32.totalorder %s14, 1
    %p53 = por %p51, %p52
    %p54 = scmp.ne.s32.totalorder %s45, %s46
    %p55 = scmp.eq.s32.totalorder %s14, 0
    %p56 = por %p54, %p55
    %p57 = scmp.ne.s32.totalorder %s45, %s46
    %p58 = scmp.eq.s32.totalorder %s15, 1
    %p59 = por %p57, %p58
    %p61 = scmp.ne.s32.totalorder %s46, %s60
    %p62 = scmp.eq.s32.totalorder %s15, 0
    %p63 = por %p61, %p62
    %s65 = sadd.s32 %s64, 1
    %p68 = scmp.eq.s32.totalorder %s9, 1
    %p69 = scmp.ne.s32.totalorder %s64, %s66
    %p70 = scmp.eq.s32.totalorder %s9, 0
    %p71 = por %p69, %p70
    %p72 = scmp.ne.s32.totalorder %s64, %s66
    %p73 = scmp.eq.s32.totalorder %s14, 1
    %p74 = por %p72, %p73
    %p75 = scmp.ne.s32.totalorder %s66, %s67
    %p76 = scmp.eq.s32.totalorder %s14, 0
    %p77 = por %p75, %p76
    %p78 = scmp.ne.s32.totalorder %s66, %s67
    %p79 = scmp.eq.s32.totalorder %s15, 1
    %p80 = por %p78, %p79
    %p82 = scmp.ne.s32.totalorder %s67, %s81
    %p83 = scmp.eq.s32.totalorder %s15, 0
    %p84 = por %p82, %p83
    %s85 = ssub.s32 %s9, %s16
    %p86 = scmp.eq.s32.totalorder %s85, 0
    %s88 = sadd.s32 %s87, 1
    %s89 = scalar_select %p86, %s87, %s88
    %p92 = pneg %p86
    %p93 = scmp.eq.s32.totalorder %s9, 1
    %p94 = por %p92, %p93
    %p95 = scmp.ne.s32.totalorder %s87, %s90
    %p96 = scmp.eq.s32.totalorder %s9, 0
    %p97 = por %p95, %p96
    %p98 = scmp.ne.s32.totalorder %s87, %s90
    %p99 = scmp.eq.s32.totalorder %s14, 1
    %p100 = por %p98, %p99
    %p101 = scmp.ne.s32.totalorder %s90, %s91
    %p102 = scmp.eq.s32.totalorder %s14, 0
    %p103 = por %p101, %p102
    %p104 = scmp.ne.s32.totalorder %s90, %s91
    %p105 = scmp.eq.s32.totalorder %s15, 1
    %p106 = por %p104, %p105
    %p108 = scmp.ne.s32.totalorder %s91, %s107
    %p109 = scmp.eq.s32.totalorder %s15, 0
    %p110 = por %p108, %p109
    %p111 = scmp.le.s32.totalorder 1, %s9
    %p112 = scmp.lt.s32.totalorder %s9, 3
    %p113 = pnand %p111, %p112
    %p114 = pneg %p113
    // Predicated region
    $region9: #{relu_conv_bn.1} parent=5 // pred_check
      _
    $region10: #{relu_conv_bn.1} parent=5 // pred_check_branch
      %116 = sbr.rel (%p113) target = $region12
    $region11: #{relu_conv_bn.1} parent=5 // pred_region
      %s117 = ssub.s32 %s9, 1
      // Predicated region
      $region13: #{relu_conv_bn.1} parent=11 // pred_check
        %p118 = pneg %p56
      $region14: #{relu_conv_bn.1} parent=11 // pred_check_branch
        %120 = sbr.rel (%p118) target = $region16
      $region15: #{relu_conv_bn.1} parent=11 // pred_region
        _
      $region16: #{relu_conv_bn.1} parent=11 // pred_fallthru
        _
      // Predicated region
      $region17: #{relu_conv_bn.1} parent=11 // pred_check
        %p121 = pneg %p77
      $region18: #{relu_conv_bn.1} parent=11 // pred_check_branch
        %123 = sbr.rel (%p121) target = $region20
      $region19: #{relu_conv_bn.1} parent=11 // pred_region
        _
      $region20: #{relu_conv_bn.1} parent=11 // pred_fallthru
        _
    $region12: #{relu_conv_bn.1} parent=5 // pred_fallthru
      _
    %p124 = scmp.lt.s32.totalorder %s9, 2
    // Predicated region
    $region21: #{relu_conv_bn.1} parent=5 // pred_check
      %p125 = pneg %p124
    $region22: #{relu_conv_bn.1} parent=5 // pred_check_branch
      %127 = sbr.rel (%p125) target = $region24
    $region23: #{relu_conv_bn.1} parent=5 // pred_region
      // Predicated region
      $region25: #{relu_conv_bn.1} parent=23 // pred_check
        %p128 = pneg %p29
      $region26: #{relu_conv_bn.1} parent=23 // pred_check_branch
        %130 = sbr.rel (%p128) target = $region28
      $region27: #{relu_conv_bn.1} parent=23 // pred_region
        %p131 = scmp.lt.s32.totalorder %s9, 1
        %s132 = scalar_select %p131, %s9, 1
        %s133 = smul.addr %s132, 4
        %s134 = smul.addr %s133, 4
        %s135 = scalar_lea.vmem %s0, %s134
      $region28: #{relu_conv_bn.1} parent=23 // pred_fallthru
        _
    $region24: #{relu_conv_bn.1} parent=5 // pred_fallthru
      _
    %p136 = scmp.le.s32.totalorder 1, %s9
    %p137 = scmp.lt.s32.totalorder %s9, 3
    %p138 = pnand %p136, %p137
    %p139 = pneg %p138
    // Predicated region
    $region29: #{relu_conv_bn.1} parent=5 // pred_check
      _
    $region30: #{relu_conv_bn.1} parent=5 // pred_check_branch
      %141 = sbr.rel (%p138) target = $region32
    $region31: #{relu_conv_bn.1} parent=5 // pred_region
      %s142 = ssub.s32 %s9, 1
      %p143 = scmp.lt.s32.totalorder %s14, 1
      %s144 = scalar_select %p143, %s14, 1
      %s145 = smul.addr %s144, 4
      %s146 = smul.addr %s145, 4
      %s147 = scalar_lea.vmem %s0, %s146
      %p148 = pneg %p35
      %p149 = pneg %p32
      %p150 = pneg %p56
      %p151 = pneg %p53
      %p152 = pneg %p77
      %p153 = pneg %p74
      %p154 = pneg %p103
      %p155 = pneg %p100
      %p156 = scmp.lt.s32.totalorder %s14, 1
      %s157 = scalar_select %p156, %s14, 1
      %s158 = smul.addr %s157, 3
      %s159 = smul.addr %s158, 8
      %s160 = scalar_lea.vmem %s3, %s159
      %p161 = scmp.lt.s32.totalorder %s14, 1
      %s162 = scalar_select %p161, %s14, 1
      %s163 = smul.addr %s162, 4
      %s164 = smul.addr %s163, 4
      %s165 = scalar_lea.vmem %s0, %s164
      %p166 = scmp.lt.s32.totalorder %s14, 1
      %s167 = scalar_select %p166, %s14, 1
      %s168 = smul.addr %s167, 3
      %s169 = smul.addr %s168, 8
      %s170 = scalar_lea.vmem %s3, %s169
      %v171 = vld [vmem:[%s165] sm:$0xff]
      %v172 = vld [vmem:[%s165 + $0x8] sm:$0xf]
      %175 = vst [vmem:[#allocation1] ss:$2 sm:$0xff] %v171
      %s176 = scalar_lea.vmem [#allocation1], 16
      %177 = vst [vmem:[%s176] ss:$2 sm:$0xff] %v172
      %v178 = vld.sshfl [vmem:[#allocation1] sm:$0xff pattern:$0x75316420]
      %v179 = vld.sshfl [vmem:[#allocation1 + $0x8] sm:$0xff pattern:$0x75316420]
      %v180 = vld.sshfl [vmem:[#allocation1 + $0x10] sm:$0xff pattern:$0x75316420]
      %184 = vst [vmem:[#allocation2] sm:$0xf] %v178
      %185 = vst [vmem:[#allocation2 + $0x8] sm:$0xf] %v179
      %186 = vst [vmem:[#allocation2 + $0x10] sm:$0xf] %v180
      %v187 = vld [vmem:[%s165] sm:$0xff]
      %v188 = vld [vmem:[%s165 + $0x8] sm:$0xff]
      %s191 = scalar_lea.vmem [#allocation1], 1
      %192 = vst [vmem:[%s191] ss:$2 sm:$0xff] %v187
      %s193 = scalar_lea.vmem [#allocation1], 17
      %194 = vst [vmem:[%s193] ss:$2 sm:$0xff] %v188
      %v195 = vld.sshfl [vmem:[#allocation1] sm:$0xff pattern:$0x75316420]
      %v196 = vld.sshfl [vmem:[#allocation1 + $0x8] sm:$0xff pattern:$0x75316420]
      %v197 = vld.sshfl [vmem:[#allocation1 + $0x10] sm:$0xff pattern:$0x75316420]
      %v198 = vld.sshfl [vmem:[#allocation1 + $0x18] sm:$0xff pattern:$0x75316420]
      %199 = vrot.lane.b32.xlu0 %v195, 127
      %v200 = vpop.permute.xlu0 %199
      %201 = vrot.lane.b32.xlu0 %v196, 127
      %v202 = vpop.permute.xlu0 %201
      %203 = vrot.lane.b32.xlu0 %v197, 127
      %v204 = vpop.permute.xlu0 %203
      %205 = vrot.lane.b32.xlu0 %v198, 127
      %v206 = vpop.permute.xlu0 %205
      %vm207 = vcmask 1039360
      %v208 = vsel %vm207, %v200, %v202
      %v209 = vsel %vm207, %v202, %v204
      %v210 = vsel %vm207, %v204, %v206
      %214 = vst [vmem:[#allocation2] sm:$0xf0] %v208
      %215 = vst [vmem:[#allocation2 + $0x8] sm:$0xf0] %v209
      %216 = vst [vmem:[#allocation2 + $0x10] sm:$0xf0] %v210
      %v217 = vld [vmem:[%s165] sm:$0xff]
      %v218 = vld [vmem:[%s165 + $0x8] sm:$0xff]
      %221 = vst [vmem:[#allocation1] ss:$2 sm:$0xff] %v217
      %s222 = scalar_lea.vmem [#allocation1], 16
      %223 = vst [vmem:[%s222] ss:$2 sm:$0xff] %v218
      %v224 = vld.sshfl [vmem:[#allocation1] sm:$0xff pattern:$0x75316420]
      %v225 = vld.sshfl [vmem:[#allocation1 + $0x8] sm:$0xff pattern:$0x75316420]
      %v226 = vld.sshfl [vmem:[#allocation1 + $0x10] sm:$0xff pattern:$0x75316420]
      %v227 = vld.sshfl [vmem:[#allocation1 + $0x18] sm:$0xff pattern:$0x75316420]
      %228 = vrot.lane.b32.xlu0 %v224, 126
      %v229 = vpop.permute.xlu0 %228
      %230 = vrot.lane.b32.xlu0 %v225, 126
      %v231 = vpop.permute.xlu0 %230
      %232 = vrot.lane.b32.xlu0 %v226, 126
      %v233 = vpop.permute.xlu0 %232
      %234 = vrot.lane.b32.xlu0 %v227, 126
      %v235 = vpop.permute.xlu0 %234
      %vm236 = vcmask 1031168
      %v237 = vsel %vm236, %v229, %v231
      %v238 = vsel %vm236, %v231, %v233
      %v239 = vsel %vm236, %v233, %v235
      %243 = vst [vmem:[#allocation2 + $0x18] sm:$0xf] %v237
      %244 = vst [vmem:[#allocation2 + $0x20] sm:$0xf] %v238
      %245 = vst [vmem:[#allocation2 + $0x28] sm:$0xf] %v239
      %v246 = vld [vmem:[%s165] sm:$0xff]
      %v247 = vld [vmem:[%s165 + $0x8] sm:$0xff]
      %s250 = scalar_lea.vmem [#allocation1], 1
      %251 = vst [vmem:[%s250] ss:$2 sm:$0xff] %v246
      %s252 = scalar_lea.vmem [#allocation1], 17
      %253 = vst [vmem:[%s252] ss:$2 sm:$0xff] %v247
      %v254 = vld.sshfl [vmem:[#allocation1] sm:$0xff pattern:$0x75316420]
      %v255 = vld.sshfl [vmem:[#allocation1 + $0x8] sm:$0xff pattern:$0x75316420]
      %v256 = vld.sshfl [vmem:[#allocation1 + $0x10] sm:$0xff pattern:$0x75316420]
      %v257 = vld.sshfl [vmem:[#allocation1 + $0x18] sm:$0xff pattern:$0x75316420]
      %258 = vrot.lane.b32.xlu0 %v254, 110
      %v259 = vpop.permute.xlu0 %258
      %260 = vrot.lane.b32.xlu0 %v255, 110
      %v261 = vpop.permute.xlu0 %260
      %262 = vrot.lane.b32.xlu0 %v256, 110
      %v263 = vpop.permute.xlu0 %262
      %264 = vrot.lane.b32.xlu0 %v257, 110
      %v265 = vpop.permute.xlu0 %264
      %vm266 = vcmask 900096
      %v267 = vsel %vm266, %v259, %v261
      %v268 = vsel %vm266, %v261, %v263
      %v269 = vsel %vm266, %v263, %v265
      %273 = vst [vmem:[#allocation2 + $0x18] sm:$0xf0] %v267
      %274 = vst [vmem:[#allocation2 + $0x20] sm:$0xf0] %v268
      %275 = vst [vmem:[#allocation2 + $0x28] sm:$0xf0] %v269
      %v276 = vld [vmem:[%s165] sm:$0xff]
      %v277 = vld [vmem:[%s165 + $0x8] sm:$0xff]
      %280 = vst [vmem:[#allocation1] ss:$2 sm:$0xff] %v276
      %s281 = scalar_lea.vmem [#allocation1], 16
      %282 = vst [vmem:[%s281] ss:$2 sm:$0xff] %v277
      %v283 = vld.sshfl [vmem:[#allocation1] sm:$0xff pattern:$0x75316420]
      %v284 = vld.sshfl [vmem:[#allocation1 + $0x8] sm:$0xff pattern:$0x75316420]
      %v285 = vld.sshfl [vmem:[#allocation1 + $0x10] sm:$0xff pattern:$0x75316420]
      %v286 = vld.sshfl [vmem:[#allocation1 + $0x18] sm:$0xff pattern:$0x75316420]
      %287 = vrot.lane.b32.xlu0 %v283, 109
      %v288 = vpop.permute.xlu0 %287
      %289 = vrot.lane.b32.xlu0 %v284, 109
      %v290 = vpop.permute.xlu0 %289
      %291 = vrot.lane.b32.xlu0 %v285, 109
      %v292 = vpop.permute.xlu0 %291
      %293 = vrot.lane.b32.xlu0 %v286, 109
      %v294 = vpop.permute.xlu0 %293
      %vm295 = vcmask 891904
      %v296 = vsel %vm295, %v288, %v290
      %v297 = vsel %vm295, %v290, %v292
      %v298 = vsel %vm295, %v292, %v294
      %302 = vst [vmem:[#allocation2 + $0x30] sm:$0xf] %v296
      %303 = vst [vmem:[#allocation2 + $0x38] sm:$0xf] %v297
      %304 = vst [vmem:[#allocation2 + $0x40] sm:$0xf] %v298
      %v305 = vld [vmem:[%s165] sm:$0xff]
      %v306 = vld [vmem:[%s165 + $0x8] sm:$0xff]
      %s309 = scalar_lea.vmem [#allocation1], 1
      %310 = vst [vmem:[%s309] ss:$2 sm:$0xff] %v305
      %s311 = scalar_lea.vmem [#allocation1], 17
      %312 = vst [vmem:[%s311] ss:$2 sm:$0xff] %v306
      %v313 = vld.sshfl [vmem:[#allocation1] sm:$0xff pattern:$0x75316420]
      %v314 = vld.sshfl [vmem:[#allocation1 + $0x8] sm:$0xff pattern:$0x75316420]
      %v315 = vld.sshfl [vmem:[#allocation1 + $0x10] sm:$0xff pattern:$0x75316420]
      %v316 = vld.sshfl [vmem:[#allocation1 + $0x18] sm:$0xff pattern:$0x75316420]
      %317 = vrot.lane.b32.xlu0 %v313, 108
      %v318 = vpop.permute.xlu0 %317
      %319 = vrot.lane.b32.xlu0 %v314, 108
      %v320 = vpop.permute.xlu0 %319
      %321 = vrot.lane.b32.xlu0 %v315, 108
      %v322 = vpop.permute.xlu0 %321
      %323 = vrot.lane.b32.xlu0 %v316, 108
      %v324 = vpop.permute.xlu0 %323
      %vm325 = vcmask 883712
      %v326 = vsel %vm325, %v318, %v320
      %v327 = vsel %vm325, %v320, %v322
      %v328 = vsel %vm325, %v322, %v324
      %332 = vst [vmem:[#allocation2 + $0x30] sm:$0xf0] %v326
      %333 = vst [vmem:[#allocation2 + $0x38] sm:$0xf0] %v327
      %334 = vst [vmem:[#allocation2 + $0x40] sm:$0xf0] %v328
      %v335 = vld [vmem:[%s165] sm:$0xff]
      %v336 = vld [vmem:[%s165 + $0x8] sm:$0xff]
      %339 = vst [vmem:[#allocation1] ss:$2 sm:$0xff] %v335
      %s340 = scalar_lea.vmem [#allocation1], 16
      %341 = vst [vmem:[%s340] ss:$2 sm:$0xff] %v336
      %v342 = vld.sshfl [vmem:[#allocation1] sm:$0xff pattern:$0x75316420]
      %v343 = vld.sshfl [vmem:[#allocation1 + $0x8] sm:$0xff pattern:$0x75316420]
      %v344 = vld.sshfl [vmem:[#allocation1 + $0x10] sm:$0xff pattern:$0x75316420]
      %v345 = vld.sshfl [vmem:[#allocation1 + $0x18] sm:$0xff pattern:$0x75316420]
      %346 = vrot.lane.b32.xlu0 %v342, 92
      %v347 = vpop.permute.xlu0 %346
      %348 = vrot.lane.b32.xlu0 %v343, 92
      %v349 = vpop.permute.xlu0 %348
      %350 = vrot.lane.b32.xlu0 %v344, 92
      %v351 = vpop.permute.xlu0 %350
      %352 = vrot.lane.b32.xlu0 %v345, 92
      %v353 = vpop.permute.xlu0 %352
      %vm354 = vcmask 752640
      %v355 = vsel %vm354, %v347, %v349
      %v356 = vsel %vm354, %v349, %v351
      %v357 = vsel %vm354, %v351, %v353
      %361 = vst [vmem:[#allocation2 + $0x48] sm:$0xf] %v355
      %362 = vst [vmem:[#allocation2 + $0x50] sm:$0xf] %v356
      %363 = vst [vmem:[#allocation2 + $0x58] sm:$0xf] %v357
      %v364 = vld [vmem:[%s165] sm:$0xff]
      %v365 = vld [vmem:[%s165 + $0x8] sm:$0xff]
      %s368 = scalar_lea.vmem [#allocation1], 1
      %369 = vst [vmem:[%s368] ss:$2 sm:$0xff] %v364
      %s370 = scalar_lea.vmem [#allocation1], 17
      %371 = vst [vmem:[%s370] ss:$2 sm:$0xff] %v365
      %v372 = vld.sshfl [vmem:[#allocation1] sm:$0xff pattern:$0x75316420]
      %v373 = vld.sshfl [vmem:[#allocation1 + $0x8] sm:$0xff pattern:$0x75316420]
      %v374 = vld.sshfl [vmem:[#allocation1 + $0x10] sm:$0xff pattern:$0x75316420]
      %v375 = vld.sshfl [vmem:[#allocation1 + $0x18] sm:$0xff pattern:$0x75316420]
      %376 = vrot.lane.b32.xlu0 %v372, 91
      %v377 = vpop.permute.xlu0 %376
      %378 = vrot.lane.b32.xlu0 %v373, 91
      %v379 = vpop.permute.xlu0 %378
      %380 = vrot.lane.b32.xlu0 %v374, 91
      %v381 = vpop.permute.xlu0 %380
      %382 = vrot.lane.b32.xlu0 %v375, 91
      %v383 = vpop.permute.xlu0 %382
      %vm384 = vcmask 744448
      %v385 = vsel %vm384, %v377, %v379
      %v386 = vsel %vm384, %v379, %v381
      %v387 = vsel %vm384, %v381, %v383
      %391 = vst [vmem:[#allocation2 + $0x48] sm:$0xf0] %v385
      %392 = vst [vmem:[#allocation2 + $0x50] sm:$0xf0] %v386
      %393 = vst [vmem:[#allocation2 + $0x58] sm:$0xf0] %v387
      %v394 = vld [vmem:[%s165] sm:$0xff]
      %v395 = vld [vmem:[%s165 + $0x8] sm:$0xff]
      %398 = vst [vmem:[#allocation1] ss:$2 sm:$0xff] %v394
      %s399 = scalar_lea.vmem [#allocation1], 16
      %400 = vst [vmem:[%s399] ss:$2 sm:$0xff] %v395
      %v401 = vld.sshfl [vmem:[#allocation1] sm:$0xff pattern:$0x75316420]
      %v402 = vld.sshfl [vmem:[#allocation1 + $0x8] sm:$0xff pattern:$0x75316420]
      %v403 = vld.sshfl [vmem:[#allocation1 + $0x10] sm:$0xff pattern:$0x75316420]
      %v404 = vld.sshfl [vmem:[#allocation1 + $0x18] sm:$0xff pattern:$0x75316420]
      %405 = vrot.lane.b32.xlu0 %v401, 90
      %v406 = vpop.permute.xlu0 %405
      %407 = vrot.lane.b32.xlu0 %v402, 90
      %v408 = vpop.permute.xlu0 %407
      %409 = vrot.lane.b32.xlu0 %v403, 90
      %v410 = vpop.permute.xlu0 %409
      %411 = vrot.lane.b32.xlu0 %v404, 90
      %v412 = vpop.permute.xlu0 %411
      %vm413 = vcmask 736256
      %v414 = vsel %vm413, %v406, %v408
      %v415 = vsel %vm413, %v408, %v410
      %v416 = vsel %vm413, %v410, %v412
      %420 = vst [vmem:[#allocation2 + $0x60] sm:$0xf] %v414
      %421 = vst [vmem:[#allocation2 + $0x68] sm:$0xf] %v415
      %422 = vst [vmem:[#allocation2 + $0x70] sm:$0xf] %v416
      %v423 = vld [vmem:[#allocation2] sm:$0xff]
      %v424 = vld [vmem:[#allocation2 + $0x8] sm:$0xff]
      %v425 = vld [vmem:[#allocation2 + $0x10] sm:$0xff]
      %v426 = vld [vmem:[#allocation2 + $0x18] sm:$0xff]
      %v427 = vld [vmem:[#allocation2 + $0x20] sm:$0xff]
      %v428 = vld [vmem:[#allocation2 + $0x28] sm:$0xff]
      %v429 = vld [vmem:[#allocation2 + $0x30] sm:$0xff]
      %v430 = vld [vmem:[#allocation2 + $0x38] sm:$0xff]
      %v431 = vld [vmem:[#allocation2 + $0x40] sm:$0xff]
      %v432 = vld [vmem:[#allocation2 + $0x48] sm:$0xff]
      %v433 = vld [vmem:[#allocation2 + $0x50] sm:$0xff]
      %v434 = vld [vmem:[#allocation2 + $0x58] sm:$0xff]
      %v435 = vld [vmem:[#allocation2 + $0x60] sm:$0xf]
      %v436 = vld [vmem:[#allocation2 + $0x68] sm:$0xf]
      %v437 = vld [vmem:[#allocation2 + $0x70] sm:$0xf]
      %v438 = vld [vmem:[%s1] sm:$0xff]
      %v439 = vld [vmem:[%s2] sm:$0xff]
      %441 = vset.pattern.permute.xlu0 0
      %442 = vperm.xlu0 %441, %v439
      %v443 = vpop.permute.xlu0 %442
      %vm445 = vcmask 293888
      %v447 = vsel %vm445, %v438, 0
      %vm449 = vcmask 1043456
      %v451 = vsel %vm449, %v435, 0
      %v454 = vsel %vm449, %v436, 0
      %v457 = vsel %vm449, %v437, 0
      %459 = vmatpush.msra.mxu0 0.0
      %460 = vmatpush.msra.mxu0 0.0
      %461 = vmatpush.msra.mxu0 0.0
      %462 = vmatpush.msra.mxu0 0.0
      %463 = vmatpush.msra.mxu0 0.0
      %464 = vmatpush.msra.mxu0 0.0
      %465 = vmatpush.msra.mxu0 0.0
      %466 = vmatpush.msra.mxu0 0.0
      %467 = vmatpush.msra.mxu0 0.0
      %468 = vmatpush.msra.mxu0 0.0
      %469 = vmatpush.msra.mxu0 0.0
      %470 = vmatpush.msra.mxu0 %v451
      %471 = vmatpush.msra.mxu0 %v432
      %472 = vmatpush.msra.mxu0 %v429
      %473 = vmatpush.msra.mxu0 %v426
      %474 = vmatpush.msra.mxu0 %v423
      %475 = vmatmul.f32.gmra.mxu0 %v447
      %v476 = vpop.f32.mrf.mxu0
      %v477 = vadd.f32 %v443, %v476
      %478 = vdwg.mxu0
      %479 = vmatpush.msra.mxu0 0.0
      %480 = vmatpush.msra.mxu0 0.0
      %481 = vmatpush.msra.mxu0 0.0
      %482 = vmatpush.msra.mxu0 0.0
      %483 = vmatpush.msra.mxu0 0.0
      %484 = vmatpush.msra.mxu0 0.0
      %485 = vmatpush.msra.mxu0 0.0
      %486 = vmatpush.msra.mxu0 0.0
      %487 = vmatpush.msra.mxu0 0.0
      %488 = vmatpush.msra.mxu0 0.0
      %489 = vmatpush.msra.mxu0 0.0
      %490 = vmatpush.msra.mxu0 %v454
      %491 = vmatpush.msra.mxu0 %v433
      %492 = vmatpush.msra.mxu0 %v430
      %493 = vmatpush.msra.mxu0 %v427
      %494 = vmatpush.msra.mxu0 %v424
      %495 = vmatmul.f32.gmra.mxu0 %v447
      %v496 = vpop.f32.mrf.mxu0
      %v497 = vadd.f32 %v443, %v496
      %498 = vdwg.mxu0
      %499 = vmatpush.msra.mxu0 0.0
      %500 = vmatpush.msra.mxu0 0.0
      %501 = vmatpush.msra.mxu0 0.0
      %502 = vmatpush.msra.mxu0 0.0
      %503 = vmatpush.msra.mxu0 0.0
      %504 = vmatpush.msra.mxu0 0.0
      %505 = vmatpush.msra.mxu0 0.0
      %506 = vmatpush.msra.mxu0 0.0
      %507 = vmatpush.msra.mxu0 0.0
      %508 = vmatpush.msra.mxu0 0.0
      %509 = vmatpush.msra.mxu0 0.0
      %510 = vmatpush.msra.mxu0 %v457
      %511 = vmatpush.msra.mxu0 %v434
      %512 = vmatpush.msra.mxu0 %v431
      %513 = vmatpush.msra.mxu0 %v428
      %514 = vmatpush.msra.mxu0 %v425
      %515 = vmatmul.f32.gmra.mxu0 %v447
      %v516 = vpop.f32.mrf.mxu0
      %v517 = vadd.f32 %v443, %v516
      %518 = vdwg.mxu0
      %519 = vst [vmem:[%s170] sm:$0xff] %v477
      %520 = vst [vmem:[%s170 + $0x8] sm:$0xff] %v497
      %521 = vst [vmem:[%s170 + $0x10] sm:$0xff] %v517
      %p522 = scmp.lt.s32.totalorder %s14, 1
      %s523 = scalar_select %p522, %s14, 1
      %s524 = smul.addr %s523, 3
      %s525 = smul.addr %s524, 8
      %s526 = scalar_lea.vmem %s3, %s525
      // Predicated region
      $region33: #{relu_conv_bn.1} parent=31 // pred_check
        %p527 = pneg %p100
      $region34: #{relu_conv_bn.1} parent=31 // pred_check_branch
        %529 = sbr.rel (%p527) target = $region36
      $region35: #{relu_conv_bn.1} parent=31 // pred_region
        _
      $region36: #{relu_conv_bn.1} parent=31 // pred_fallthru
        _
    $region32: #{relu_conv_bn.1} parent=5 // pred_fallthru
      _
    %p530 = scmp.le.s32.totalorder 2, %s9
    // Predicated region
    $region37: #{relu_conv_bn.1} parent=5 // pred_check
      %p531 = pneg %p530
    $region38: #{relu_conv_bn.1} parent=5 // pred_check_branch
      %533 = sbr.rel (%p531) target = $region40
    $region39: #{relu_conv_bn.1} parent=5 // pred_region
      %s534 = ssub.s32 %s9, 2
      // Predicated region
      $region41: #{relu_conv_bn.1} parent=39 // pred_check
        %p535 = pneg %p106
      $region42: #{relu_conv_bn.1} parent=39 // pred_check_branch
        %537 = sbr.rel (%p535) target = $region44
      $region43: #{relu_conv_bn.1} parent=39 // pred_region
        %p538 = scmp.lt.s32.totalorder %s15, 1
        %s539 = scalar_select %p538, %s15, 1
        %s540 = smul.addr %s539, 3
        %s541 = smul.addr %s540, 8
        %s542 = scalar_lea.vmem %s3, %s541
      $region44: #{relu_conv_bn.1} parent=39 // pred_fallthru
        _
    $region40: #{relu_conv_bn.1} parent=5 // pred_fallthru
      _
  $region6: #{relu_conv_bn.1} parent=0 // loop_footer
    %s13 = sadd.s32 1, %s9
  $region7: #{relu_conv_bn.1} parent=0 // loop_footer_branch
    %8 = sbr.rel target = $region3
  $region8: #{relu_conv_bn.1} parent=0 // loop_exit
    _

</llo_original>
